<compile_context>
chip_gen: v7x
topology: tpu7x:2x2x1
jax: 0.10.0
libtpu: 0.0.40
codegen_flags: <defaults>
</compile_context>

<pallas_src>
import jax
import jax.numpy as jnp
from jax.experimental import pallas as pl
from jax.experimental.pallas import tpu as pltpu

_LANE = 128


def _round_up(v: int, m: int) -> int:
    return (v + m - 1) // m * m


def _pick_hw_tiling(c: int, hw: int, itemsize: int):
    """Pick a lane-dense HW tile that keeps double-buffered in+out under budget."""
    hw128 = _round_up(hw, _LANE)
    # 2x double-buffered (input + output) tiles; conservative so it fits every
    # generation's scoped-VMEM default (v5e 16 MiB, v6e/v7x 32 MiB).
    budget_bytes = 8 * 1024 * 1024
    bytes_per_lane = 4 * c * max(itemsize, 4)
    t = (budget_bytes // bytes_per_lane) // _LANE * _LANE
    t = max(_LANE, min(t, 2048, hw128))
    n_t = -(-hw128 // t)                       # cdiv
    t = _round_up(-(-hw128 // n_t), _LANE)     # balance tiles, limit padding
    return t, n_t, n_t * t


def _stats_kernel(x_ref, sum_ref, sq_ref):
    # x_ref view: (C, T_HW) for one (batch, hw-tile). ReLU, then f32 accumulation.
    xr = jnp.maximum(x_ref[...], 0).astype(jnp.float32)
    sum_ref[...] = jnp.sum(xr, axis=1, keepdims=True)       # (C, 1)
    sq_ref[...] = jnp.sum(xr * xr, axis=1, keepdims=True)   # (C, 1)


def _bn_apply_kernel(x_ref, scale_ref, shift_ref, o_ref):
    # Fused ReLU + per-channel affine normalize: one mul + one add per element.
    xr = jnp.maximum(x_ref[...], 0)
    o_ref[...] = (xr * scale_ref[...] + shift_ref[...]).astype(o_ref.dtype)


def relu_bn2d(x: jax.Array, gamma=None, beta=None, epsilon: float = 1e-5) -> jax.Array:
    """Pallas TPU forward of ReLu_BN2d: BatchNorm2d(ReLU(x)), batch statistics."""
    n, c, h, w = x.shape
    hw = h * w
    if gamma is None:
        gamma = jnp.ones((c,), jnp.float32)
    if beta is None:
        beta = jnp.zeros((c,), jnp.float32)

    t_hw, n_t, hw_p = _pick_hw_tiling(c, hw, x.dtype.itemsize)

    x2 = x.reshape(n, c, hw)
    if hw_p != hw:
        # Zero padding: relu(0)=0 contributes nothing to the sums; the true
        # element count (n*h*w) is used when finalizing the statistics.
        x2 = jnp.pad(x2, ((0, 0), (0, 0), (0, hw_p - hw)))

    cparams = pltpu.CompilerParams(
        dimension_semantics=("parallel", "parallel"),
        vmem_limit_bytes=32 * 1024 * 1024,
    )

    # ---- Pass 1: partial per-channel sums of relu(x) and relu(x)^2 ----
    psum, psq = pl.pallas_call(
        _stats_kernel,
        out_shape=(
            jax.ShapeDtypeStruct((n, n_t, c, 1), jnp.float32),
            jax.ShapeDtypeStruct((n, n_t, c, 1), jnp.float32),
        ),
        grid=(n, n_t),
        in_specs=[pl.BlockSpec((None, c, t_hw), lambda b, t: (b, 0, t))],
        out_specs=(
            pl.BlockSpec((None, None, c, 1), lambda b, t: (b, t, 0, 0)),
            pl.BlockSpec((None, None, c, 1), lambda b, t: (b, t, 0, 0)),
        ),
        compiler_params=cparams,
    )(x2)

    count = float(n * hw)
    ch_sum = jnp.sum(psum, axis=(0, 1))                       # (C, 1)
    ch_sq = jnp.sum(psq, axis=(0, 1))                         # (C, 1)
    mean = ch_sum / count
    var = jnp.maximum(ch_sq / count - mean * mean, 0.0)       # biased var (BN training)
    inv_std = jax.lax.rsqrt(var + epsilon)
    g = gamma.astype(jnp.float32).reshape(c, 1)
    b_ = beta.astype(jnp.float32).reshape(c, 1)
    scale = g * inv_std                                       # (C, 1)
    shift = b_ - mean * scale                                 # (C, 1)

    # ---- Pass 2: fused relu + scale/shift over lane-dense HW tiles ----
    out = pl.pallas_call(
        _bn_apply_kernel,
        out_shape=jax.ShapeDtypeStruct((n, c, hw_p), x.dtype),
        grid=(n, n_t),
        in_specs=[
            pl.BlockSpec((None, c, t_hw), lambda b, t: (b, 0, t)),
            pl.BlockSpec((c, 1), lambda b, t: (0, 0)),
            pl.BlockSpec((c, 1), lambda b, t: (0, 0)),
        ],
        out_specs=pl.BlockSpec((None, c, t_hw), lambda b, t: (b, 0, t)),
        compiler_params=cparams,
    )(x2, scale, shift)

    if hw_p != hw:
        out = out[:, :, :hw]
    return out.reshape(n, c, h, w)


def _reference(x, gamma, beta, eps):
    xr = jnp.maximum(x.astype(jnp.float32), 0.0)
    mean = xr.mean(axis=(0, 2, 3), keepdims=True)
    var = jnp.mean((xr - mean) ** 2, axis=(0, 2, 3), keepdims=True)
    y = (xr - mean) * jax.lax.rsqrt(var + eps)
    y = y * gamma.reshape(1, -1, 1, 1) + beta.reshape(1, -1, 1, 1)
    return y.astype(x.dtype)


if __name__ == "__main__":
    key = jax.random.PRNGKey(0)
    k1, k2, k3, k4 = jax.random.split(key, 4)
    x = jax.random.normal(k1, (2, 4, 16, 16), dtype=jnp.float32)
    gamma = 1.0 + 0.1 * jax.random.normal(k2, (4,), dtype=jnp.float32)
    beta = 0.1 * jax.random.normal(k3, (4,), dtype=jnp.float32)

    y = relu_bn2d(x, gamma, beta, epsilon=1e-5)
    jax.block_until_ready(y)
    y_ref = _reference(x, gamma, beta, 1e-5)
    assert y.shape == x.shape and y.dtype == x.dtype
    assert jnp.allclose(y, y_ref, atol=1e-5, rtol=1e-5)

    # Non-multiple-of-128 spatial size exercises the lane-padding path.
    x_odd = jax.random.normal(k4, (2, 4, 7, 9), dtype=jnp.float32)
    y_odd = relu_bn2d(x_odd, gamma, beta, epsilon=1e-5)
    jax.block_until_ready(y_odd)
    assert jnp.allclose(y_odd, _reference(x_odd, gamma, beta, 1e-5), atol=1e-5, rtol=1e-5)

    print("KERNEL_OK")
</pallas_src>

<mosaic_0001>
module attributes {stable_mosaic.version = 11 : i64} {
  func.func @_stats_kernel(%arg0: i32, %arg1: i32, %arg2: memref<1x4x256xf32, #tpu.memory_space<vmem>>, %arg3: memref<1x1x4x1xf32, #tpu.memory_space<vmem>>, %arg4: memref<1x1x4x1xf32, #tpu.memory_space<vmem>>) attributes {dimension_semantics = [#tpu.dimension_semantics<parallel>, #tpu.dimension_semantics<parallel>], iteration_bounds = array<i64: 2, 1>, scalar_prefetch = 0 : i64, scratch_operands = 0 : i64, tpu.core_type = #tpu.core_type<tc>, window_params = [{transform_indices = @transform_0, window_bounds = array<i64: 1, 4, 256>}, {transform_indices = @transform_1, window_bounds = array<i64: 1, 1, 4, 1>}, {transform_indices = @transform_2, window_bounds = array<i64: 1, 1, 4, 1>}]} {
    %c0 = arith.constant 0 : index
    %c0_0 = arith.constant 0 : index
    %c0_1 = arith.constant 0 : index
    %0 = vector.load %arg2[%c0, %c0_0, %c0_1] : memref<1x4x256xf32, #tpu.memory_space<vmem>>, vector<1x4x256xf32>
    %1 = vector.shape_cast %0 : vector<1x4x256xf32> to vector<4x256xf32>
    %cst = arith.constant 0.000000e+00 : f32
    %2 = vector.broadcast %cst : f32 to vector<4x256xf32>
    %3 = arith.maximumf %1, %2 : vector<4x256xf32>
    %cst_2 = arith.constant dense<0.000000e+00> : vector<4xf32>
    %4 = vector.multi_reduction <add>, %3, %cst_2 [1] : vector<4x256xf32> to vector<4xf32>
    %5 = vector.shape_cast %4 : vector<4xf32> to vector<4x1xf32>
    %c0_3 = arith.constant 0 : index
    %c0_4 = arith.constant 0 : index
    %c0_5 = arith.constant 0 : index
    %c0_6 = arith.constant 0 : index
    %6 = vector.load %arg3[%c0_3, %c0_4, %c0_5, %c0_6] : memref<1x1x4x1xf32, #tpu.memory_space<vmem>>, vector<1x1x4x1xf32>
    %7 = vector.shape_cast %6 : vector<1x1x4x1xf32> to vector<4x1xf32>
    %8 = vector.shape_cast %5 : vector<4x1xf32> to vector<1x1x4x1xf32>
    tpu.vector_store %arg3[%c0_3, %c0_4, %c0_5, %c0_6], %8 {strides = array<i32>} : memref<1x1x4x1xf32, #tpu.memory_space<vmem>>, vector<1x1x4x1xf32>,
    %9 = arith.mulf %3, %3 : vector<4x256xf32>
    %cst_7 = arith.constant dense<0.000000e+00> : vector<4xf32>
    %10 = vector.multi_reduction <add>, %9, %cst_7 [1] : vector<4x256xf32> to vector<4xf32>
    %11 = vector.shape_cast %10 : vector<4xf32> to vector<4x1xf32>
    %c0_8 = arith.constant 0 : index
    %c0_9 = arith.constant 0 : index
    %c0_10 = arith.constant 0 : index
    %c0_11 = arith.constant 0 : index
    %12 = vector.load %arg4[%c0_8, %c0_9, %c0_10, %c0_11] : memref<1x1x4x1xf32, #tpu.memory_space<vmem>>, vector<1x1x4x1xf32>
    %13 = vector.shape_cast %12 : vector<1x1x4x1xf32> to vector<4x1xf32>
    %14 = vector.shape_cast %11 : vector<4x1xf32> to vector<1x1x4x1xf32>
    tpu.vector_store %arg4[%c0_8, %c0_9, %c0_10, %c0_11], %14 {strides = array<i32>} : memref<1x1x4x1xf32, #tpu.memory_space<vmem>>, vector<1x1x4x1xf32>,
    return
  }
  func.func @transform_0(%arg0: i32, %arg1: i32) -> (i32, i32, i32) {
    %c0_i32 = arith.constant 0 : i32
    %c0_i32_0 = arith.constant 0 : i32
    return %arg0, %c0_i32, %arg1 : i32, i32, i32
  }
  func.func @transform_1(%arg0: i32, %arg1: i32) -> (i32, i32, i32, i32) {
    %c0_i32 = arith.constant 0 : i32
    %c0_i32_0 = arith.constant 0 : i32
    %c0_i32_1 = arith.constant 0 : i32
    return %arg0, %arg1, %c0_i32, %c0_i32_0 : i32, i32, i32, i32
  }
  func.func @transform_2(%arg0: i32, %arg1: i32) -> (i32, i32, i32, i32) {
    %c0_i32 = arith.constant 0 : i32
    %c0_i32_0 = arith.constant 0 : i32
    %c0_i32_1 = arith.constant 0 : i32
    return %arg0, %arg1, %c0_i32, %c0_i32_0 : i32, i32, i32, i32
  }
}

</mosaic_0001>

<llo_original>
// kernel: tpu_custom_call.1
$region0: #{tpu_custom_call.1}
  #allocation0 [shape = 'u32[]', space=smem, size = 0x4, offset = 0x4, fixed_abs, tag = 'smem constant byte address 0x4 - core index']
  #allocation1 [shape = 'u32[144,128]{1,0:T(1,128)}', space=vmem, size = 0x12000, scoped, tag = 'internal scratch']
  %s0 = inlined_call_operand.hbm [shape: f32[2,4,256], index: 0, kind: input, shape index: {}]
  %s1 = inlined_call_operand.vmem [shape: f32[2,1,4,1], index: 1, kind: output, shape index: {0}]
  %s2 = inlined_call_operand.vmem [shape: f32[2,1,4,1], index: 2, kind: output, shape index: {1}]
  %3 = xla_tuple %s1, %s2
  %s4 = sld [smem:[#allocation0]]
  $region49: #{tpu_custom_call.1} parent=0
    _
  %s6 = ssub.s32 1, %s4
  %s7 = scalar_select 0, %s6, %s4
  $region1: #{tpu_custom_call.1} parent=0
    #allocation2 [shape = 'u8[8192]{0}', space=vmem, size = 0x2000, scoped, tag = 'input window, operand 0']
    #allocation3 [shape = 's32[2]{0}', space=sflag, size = 0x8, scoped, tag = 'scoped memory for tpu_custom_call.1']
    %8 = vsyncpa [#allocation3], 0
    %s9 = scalar_lea.sflag [#allocation3], 1
    %10 = vsyncpa %s9, 0
    loop: start=0, step=1, limit=4
    $region2: #{tpu_custom_call.1} parent=1 // loop_pre_header
      _
    $region3: #{tpu_custom_call.1} parent=1 // loop_header
      %s12 = sphi 0, %s16
      %p13 = scmp.ge.s32.totalorder %s12, 4
      %s19 = sphi 0, %s31
      %s20 = sphi 0, %s27
      %s21 = sphi 0, %s19
      %s22 = sphi 0, %s20
      %s23 = sphi 0, %s21
      %s24 = sphi 0, %s22
      %s36 = sphi 0, %s38
      %s39 = sphi 0, %s36
      %s40 = sphi 0, %s39
      %s56 = sphi 0, %s40
      %s64 = sphi 0, %s66
      %s67 = sphi 0, %s64
      %s68 = sphi 0, %s67
      %s84 = sphi 0, %s68
      %s92 = sphi 0, %s94
      %s95 = sphi 0, %s92
      %s96 = sphi 0, %s95
      %s112 = sphi 0, %s96
    $region4: #{tpu_custom_call.1} parent=1 // loop_header_branch
      %15 = sbr.rel (%p13) target = $region8
    $region5: #{tpu_custom_call.1} parent=1 // loop_body
      %s17 = ssub.s32 %s12, 1
      %s18 = ssub.s32 %s12, 2
      %s25 = sadd.s32 1, %s20
      %p26 = scmp.ge.s32.totalorder %s25, 1
      %s27 = scalar_select %p26, 0, %s25
      %s28 = sadd.s32 1, %s19
      %s29 = scalar_select %p26, %s28, %s19
      %p30 = scmp.ge.s32.totalorder %s29, 2
      %s31 = scalar_select %p30, 0, %s29
      %s32 = ssub.s32 %s19, %s31
      %s33 = ssub.s32 %s20, %s27
      %s34 = sor.u32 %s32, %s33
      %p35 = scmp.eq.s32.totalorder %s34, 0
      %s37 = sadd.s32 %s36, 1
      %s38 = scalar_select %p35, %s36, %s37
      %p41 = pneg %p35
      %p42 = scmp.eq.s32.totalorder %s12, 1
      %p43 = por %p41, %p42
      %p44 = scmp.ne.s32.totalorder %s36, %s39
      %p45 = scmp.eq.s32.totalorder %s12, 0
      %p46 = por %p44, %p45
      %p47 = scmp.ne.s32.totalorder %s36, %s39
      %p48 = scmp.eq.s32.totalorder %s17, 1
      %p49 = por %p47, %p48
      %p50 = scmp.ne.s32.totalorder %s39, %s40
      %p51 = scmp.eq.s32.totalorder %s17, 0
      %p52 = por %p50, %p51
      %p53 = scmp.ne.s32.totalorder %s39, %s40
      %p54 = scmp.eq.s32.totalorder %s18, 1
      %p55 = por %p53, %p54
      %p57 = scmp.ne.s32.totalorder %s40, %s56
      %p58 = scmp.eq.s32.totalorder %s18, 0
      %p59 = por %p57, %p58
      %s60 = ssub.s32 %s19, %s31
      %s61 = ssub.s32 %s20, %s27
      %s62 = sor.u32 %s60, %s61
      %p63 = scmp.eq.s32.totalorder %s62, 0
      %s65 = sadd.s32 %s64, 1
      %s66 = scalar_select %p63, %s64, %s65
      %p69 = pneg %p63
      %p70 = scmp.eq.s32.totalorder %s12, 1
      %p71 = por %p69, %p70
      %p72 = scmp.ne.s32.totalorder %s64, %s67
      %p73 = scmp.eq.s32.totalorder %s12, 0
      %p74 = por %p72, %p73
      %p75 = scmp.ne.s32.totalorder %s64, %s67
      %p76 = scmp.eq.s32.totalorder %s17, 1
      %p77 = por %p75, %p76
      %p78 = scmp.ne.s32.totalorder %s67, %s68
      %p79 = scmp.eq.s32.totalorder %s17, 0
      %p80 = por %p78, %p79
      %p81 = scmp.ne.s32.totalorder %s67, %s68
      %p82 = scmp.eq.s32.totalorder %s18, 1
      %p83 = por %p81, %p82
      %p85 = scmp.ne.s32.totalorder %s68, %s84
      %p86 = scmp.eq.s32.totalorder %s18, 0
      %p87 = por %p85, %p86
      %s88 = ssub.s32 %s19, %s31
      %s89 = ssub.s32 %s20, %s27
      %s90 = sor.u32 %s88, %s89
      %p91 = scmp.eq.s32.totalorder %s90, 0
      %s93 = sadd.s32 %s92, 1
      %s94 = scalar_select %p91, %s92, %s93
      %p97 = pneg %p91
      %p98 = scmp.eq.s32.totalorder %s12, 1
      %p99 = por %p97, %p98
      %p100 = scmp.ne.s32.totalorder %s92, %s95
      %p101 = scmp.eq.s32.totalorder %s12, 0
      %p102 = por %p100, %p101
      %p103 = scmp.ne.s32.totalorder %s92, %s95
      %p104 = scmp.eq.s32.totalorder %s17, 1
      %p105 = por %p103, %p104
      %p106 = scmp.ne.s32.totalorder %s95, %s96
      %p107 = scmp.eq.s32.totalorder %s17, 0
      %p108 = por %p106, %p107
      %p109 = scmp.ne.s32.totalorder %s95, %s96
      %p110 = scmp.eq.s32.totalorder %s18, 1
      %p111 = por %p109, %p110
      %p113 = scmp.ne.s32.totalorder %s96, %s112
      %p114 = scmp.eq.s32.totalorder %s18, 0
      %p115 = por %p113, %p114
      %p116 = scmp.le.s32.totalorder 1, %s12
      %p117 = scmp.lt.s32.totalorder %s12, 3
      %p118 = pnand %p116, %p117
      %p119 = pneg %p118
      // Predicated region
      $region9: #{tpu_custom_call.1} parent=5 // pred_check
        _
      $region10: #{tpu_custom_call.1} parent=5 // pred_check_branch
        %121 = sbr.rel (%p118) target = $region12
      $region11: #{tpu_custom_call.1} parent=5 // pred_region
        %s122 = ssub.s32 %s12, 1
      $region12: #{tpu_custom_call.1} parent=5 // pred_fallthru
        _
      %p123 = scmp.lt.s32.totalorder %s12, 2
      // Predicated region
      $region13: #{tpu_custom_call.1} parent=5 // pred_check
        %p124 = pneg %p123
      $region14: #{tpu_custom_call.1} parent=5 // pred_check_branch
        %126 = sbr.rel (%p124) target = $region16
      $region15: #{tpu_custom_call.1} parent=5 // pred_region
        // Predicated region
        $region17: #{tpu_custom_call.1} parent=15 // pred_check
          %p127 = pneg %p46
        $region18: #{tpu_custom_call.1} parent=15 // pred_check_branch
          %129 = sbr.rel (%p127) target = $region20
        $region19: #{tpu_custom_call.1} parent=15 // pred_region
          %s130 = sand.u32 %s36, 1
          %s131 = scalar_lea.sflag [#allocation3], %s130
          %s132 = sand.u32 %s36, 1
          %s133 = smul.addr %s132, 8
          %s134 = scalar_lea.vmem [#allocation2], %s133
          %s135 = smul.u32 2, %s20
          %s137 = ssub.s32 128, 128
          %138 = vsyncadd %s131, %s137
          %s139 = smul.addr %s19, 2
          %s140 = sadd.s32 %s135, %s139
          %s141 = smul.addr %s140, 64
          %s142 = scalar_lea.hbm %s0, %s141
          %s144 = sshll.u32 %s134, 4
          %s145 = int_to_ptr.vmem [resolvable:$true] %s144
          %147 = dma.hbm_to_vmem [thread:$0]  %s142, 128, %s145, %s131
        $region20: #{tpu_custom_call.1} parent=15 // pred_fallthru
          _
      $region16: #{tpu_custom_call.1} parent=5 // pred_fallthru
        _
      %p148 = scmp.le.s32.totalorder 1, %s12
      %p149 = scmp.lt.s32.totalorder %s12, 3
      %p150 = pnand %p148, %p149
      %p151 = pneg %p150
      // Predicated region
      $region21: #{tpu_custom_call.1} parent=5 // pred_check
        _
      $region22: #{tpu_custom_call.1} parent=5 // pred_check_branch
        %153 = sbr.rel (%p150) target = $region24
      $region23: #{tpu_custom_call.1} parent=5 // pred_region
        %s154 = ssub.s32 %s12, 1
        %s155 = sand.u32 %s39, 1
        %s156 = scalar_lea.sflag [#allocation3], %s155
        %s157 = sand.u32 %s39, 1
        %s158 = smul.addr %s157, 8
        %s159 = scalar_lea.vmem [#allocation2], %s158
        // Predicated region
        $region25: #{tpu_custom_call.1} parent=23 // pred_check
          %p160 = pneg %p52
        $region26: #{tpu_custom_call.1} parent=23 // pred_check_branch
          %162 = sbr.rel (%p160) target = $region28
        $region27: #{tpu_custom_call.1} parent=23 // pred_region
          %163 = dma.done %s156, 128
        $region28: #{tpu_custom_call.1} parent=23 // pred_fallthru
          _
        %s164 = sand.u32 %s39, 1
        %s165 = scalar_lea.sflag [#allocation3], %s164
        %s166 = sand.u32 %s39, 1
        %s167 = smul.addr %s166, 8
        %s168 = scalar_lea.vmem [#allocation2], %s167
        %p169 = pneg %p52
        %p170 = pneg %p49
        %p171 = pneg %p80
        %p172 = pneg %p77
        %p173 = scmp.lt.s32.totalorder %s21, 1
        %s174 = scalar_select %p173, %s21, 1
        %p175 = scmp.lt.s32.totalorder %s22, 0
        %s176 = scalar_select %p175, %s22, 0
        %s177 = sadd.s32 %s176, %s174
        %s178 = smul.addr %s177, 4
        %s179 = scalar_lea.vmem %s1, %s178
        %p180 = pneg %p108
        %p181 = pneg %p105
        %p182 = scmp.lt.s32.totalorder %s21, 1
        %s183 = scalar_select %p182, %s21, 1
        %p184 = scmp.lt.s32.totalorder %s22, 0
        %s185 = scalar_select %p184, %s22, 0
        %s186 = sadd.s32 %s185, %s183
        %s187 = smul.addr %s186, 4
        %s188 = scalar_lea.vmem %s2, %s187
        %s189 = smul.u32 2, %s22
        %p190 = scmp.lt.s32.totalorder %s21, 1
        %s191 = scalar_select %p190, %s21, 1
        %p192 = scmp.lt.s32.totalorder %s22, 0
        %s193 = scalar_select %p192, %s22, 0
        %s194 = sadd.s32 %s193, %s191
        %s195 = smul.addr %s194, 4
        %s196 = scalar_lea.vmem %s1, %s195
        %p197 = scmp.lt.s32.totalorder %s21, 1
        %s198 = scalar_select %p197, %s21, 1
        %p199 = scmp.lt.s32.totalorder %s22, 0
        %s200 = scalar_select %p199, %s22, 0
        %s201 = sadd.s32 %s200, %s198
        %s202 = smul.addr %s201, 4
        %s203 = scalar_lea.vmem %s2, %s202
        %v204 = vld [vmem:[%s159] sm:$0xff]
        %v205 = vmax.f32 %v204, 0.0
        %v207 = vcombine.high %v205, %v205
        %vm209 = vcmask 1043456
        %v210 = vsel %vm209, %v205, 0.0
        %v211 = vsel %vm209, %v207, 0.0
        %v212 = vadd.f32 %v210, %v211
        %213 = vadd.xlane.f32.xlu0 %v212
        %v214 = vpop.xlane.xlu0 %213
        %vm215 = vcmask 3072
        %216 = vst.msk [vmem:[%s196] sm:$0xf] %vm215, %v214
        %v217 = vmul.f32 %v205, %v205
        %v219 = vcombine.high %v217, %v217
        %v221 = vsel %vm209, %v217, 0.0
        %v222 = vsel %vm209, %v219, 0.0
        %v223 = vadd.f32 %v221, %v222
        %224 = vadd.xlane.f32.xlu0 %v223
        %v225 = vpop.xlane.xlu0 %224
        %226 = vst.msk [vmem:[%s203] sm:$0xf] %vm215, %v225
        %p227 = scmp.lt.s32.totalorder %s21, 1
        %s228 = scalar_select %p227, %s21, 1
        %p229 = scmp.lt.s32.totalorder %s22, 0
        %s230 = scalar_select %p229, %s22, 0
        %s231 = sadd.s32 %s230, %s228
        %s232 = smul.addr %s231, 4
        %s233 = scalar_lea.vmem %s1, %s232
        %p234 = scmp.lt.s32.totalorder %s21, 1
        %s235 = scalar_select %p234, %s21, 1
        %p236 = scmp.lt.s32.totalorder %s22, 0
        %s237 = scalar_select %p236, %s22, 0
        %s238 = sadd.s32 %s237, %s235
        %s239 = smul.addr %s238, 4
        %s240 = scalar_lea.vmem %s2, %s239
        // Predicated region
        $region29: #{tpu_custom_call.1} parent=23 // pred_check
          %p241 = pneg %p77
        $region30: #{tpu_custom_call.1} parent=23 // pred_check_branch
          %243 = sbr.rel (%p241) target = $region32
        $region31: #{tpu_custom_call.1} parent=23 // pred_region
          _
        $region32: #{tpu_custom_call.1} parent=23 // pred_fallthru
          _
        // Predicated region
        $region33: #{tpu_custom_call.1} parent=23 // pred_check
          %p244 = pneg %p105
        $region34: #{tpu_custom_call.1} parent=23 // pred_check_branch
          %246 = sbr.rel (%p244) target = $region36
        $region35: #{tpu_custom_call.1} parent=23 // pred_region
          _
        $region36: #{tpu_custom_call.1} parent=23 // pred_fallthru
          _
      $region24: #{tpu_custom_call.1} parent=5 // pred_fallthru
        _
      %p247 = scmp.le.s32.totalorder 2, %s12
      // Predicated region
      $region37: #{tpu_custom_call.1} parent=5 // pred_check
        %p248 = pneg %p247
      $region38: #{tpu_custom_call.1} parent=5 // pred_check_branch
        %250 = sbr.rel (%p248) target = $region40
      $region39: #{tpu_custom_call.1} parent=5 // pred_region
        %s251 = ssub.s32 %s12, 2
        // Predicated region
        $region41: #{tpu_custom_call.1} parent=39 // pred_check
          %p252 = pneg %p83
        $region42: #{tpu_custom_call.1} parent=39 // pred_check_branch
          %254 = sbr.rel (%p252) target = $region44
        $region43: #{tpu_custom_call.1} parent=39 // pred_region
          %p255 = scmp.lt.s32.totalorder %s23, 1
          %s256 = scalar_select %p255, %s23, 1
          %p257 = scmp.lt.s32.totalorder %s24, 0
          %s258 = scalar_select %p257, %s24, 0
          %s259 = sadd.s32 %s258, %s256
          %s260 = smul.addr %s259, 4
          %s261 = scalar_lea.vmem %s1, %s260
        $region44: #{tpu_custom_call.1} parent=39 // pred_fallthru
          _
        // Predicated region
        $region45: #{tpu_custom_call.1} parent=39 // pred_check
          %p262 = pneg %p111
        $region46: #{tpu_custom_call.1} parent=39 // pred_check_branch
          %264 = sbr.rel (%p262) target = $region48
        $region47: #{tpu_custom_call.1} parent=39 // pred_region
          %p265 = scmp.lt.s32.totalorder %s23, 1
          %s266 = scalar_select %p265, %s23, 1
          %p267 = scmp.lt.s32.totalorder %s24, 0
          %s268 = scalar_select %p267, %s24, 0
          %s269 = sadd.s32 %s268, %s266
          %s270 = smul.addr %s269, 4
          %s271 = scalar_lea.vmem %s2, %s270
        $region48: #{tpu_custom_call.1} parent=39 // pred_fallthru
          _
      $region40: #{tpu_custom_call.1} parent=5 // pred_fallthru
        _
    $region6: #{tpu_custom_call.1} parent=1 // loop_footer
      %s16 = sadd.s32 1, %s12
    $region7: #{tpu_custom_call.1} parent=1 // loop_footer_branch
      %11 = sbr.rel target = $region3
    $region8: #{tpu_custom_call.1} parent=1 // loop_exit
      _
    %272 = vsyncpa [#allocation3], 1
    %s273 = scalar_lea.sflag [#allocation3], 1
    %274 = vsyncpa %s273, 1

</llo_original>
